<compile_context>
chip_gen: v5e
topology: v5e:2x2
jax: 0.10.0
libtpu: 0.0.40
codegen_flags: <defaults>
</compile_context>

<pallas_src>
import jax
import jax.numpy as jnp
from jax.experimental import pallas as pl
from jax.experimental.pallas import tpu as pltpu

LATENT_DIM = 256
HIDDEN = 128
NUM_SUBGOALS = 8
MAX_TM = 1024   # max batch rows per grid step (VMEM use ~2 MiB with double buffering)


def _round_up(x, m):
    return (x + m - 1) // m * m


def _choose_tm(batch):
    """Batch rows per grid step."""
    if batch < 64:
        # Single step; a full-extent block is always a legal block shape.
        return batch
    # Guarantee >=2 grid steps so both v7x TensorCores get work; cap the per-step tile.
    return min(MAX_TM, _round_up(-(-batch // 2), 16))


def _compute_logits(x_ref, w1_ref, b1_ref, w2_ref, b2_ref):
    """Shared two-layer MLP body.  Returns f32 logits [tm, num_subgoals]."""
    # In-kernel bf16 cast of x (hidden under DMA in this memory-bound kernel);
    # both matmuls accumulate in f32 on the MXU.
    x = x_ref[...].astype(jnp.bfloat16)
    h = jnp.dot(x, w1_ref[...], preferred_element_type=jnp.float32)
    h = jnp.maximum(h + b1_ref[...], 0.0)            # f32 elementwise (v5e-safe)
    h = h.astype(jnp.bfloat16)
    return jnp.dot(h, w2_ref[...], preferred_element_type=jnp.float32) + b2_ref[...]


def planner_logits_kernel(x_ref, w1_ref, b1_ref, w2_ref, b2_ref, out_ref):
    # out_ref: [tm, num_subgoals] f32 -- narrow, un-padded output.
    out_ref[...] = _compute_logits(x_ref, w1_ref, b1_ref, w2_ref, b2_ref).astype(
        out_ref.dtype)


def planner_argmax_kernel(x_ref, w1_ref, b1_ref, w2_ref, b2_ref, idx_ref):
    # Fused greedy subgoal selection: argmax over the 8 logits (softmax skipped -- it is
    # monotone).  Cross-lane max/min run on the XLU, which is idle in this kernel.
    logits = _compute_logits(x_ref, w1_ref, b1_ref, w2_ref, b2_ref)
    m = jnp.max(logits, axis=-1, keepdims=True)                       # [tm, 1]
    col = jax.lax.broadcasted_iota(jnp.int32, logits.shape, 1).astype(jnp.float32)
    # First index achieving the max (matches jnp.argmax tie-breaking).
    idx = jnp.min(jnp.where(logits == m, col, jnp.float32(logits.shape[-1])),
                  axis=-1, keepdims=True)
    idx_ref[...] = idx.astype(idx_ref.dtype)                          # [tm, 1] int32


def _planner_call(kernel, out_width, out_dtype, latent_state, w1, b1, w2, b2):
    B, latent_dim = latent_state.shape
    hidden = w1.shape[1]
    num_subgoals = w2.shape[1]

    tm = _choose_tm(B)
    grid = (pl.cdiv(B, tm),)   # partial last tile handled by Pallas -- no jnp.pad of x

    # Tiny one-time weight/bias prep (~100 KiB total).
    w1b = w1.astype(jnp.bfloat16)
    w2b = w2.astype(jnp.bfloat16)
    b1f = b1.reshape(1, hidden).astype(jnp.float32)
    b2f = b2.reshape(1, num_subgoals).astype(jnp.float32)

    vmem_resident = pl.BlockSpec(memory_space=pltpu.MemorySpace.VMEM)

    return pl.pallas_call(
        kernel,
        out_shape=jax.ShapeDtypeStruct((B, out_width), out_dtype),
        grid=grid,
        in_specs=[
            pl.BlockSpec((tm, latent_dim), lambda i: (i, 0)),  # x: pipelined batch tiles
            vmem_resident,  # w1  (resident across grid steps, no double-buffering)
            vmem_resident,  # b1
            vmem_resident,  # w2
            vmem_resident,  # b2
        ],
        out_specs=pl.BlockSpec((tm, out_width), lambda i: (i, 0)),
        compiler_params=pltpu.CompilerParams(
            dimension_semantics=("parallel",),  # batch rows data-parallel (v7x megacore)
        ),
    )(latent_state, w1b, b1f, w2b, b2f)


@jax.jit
def hierarchical_planner_forward(latent_state, w1, b1, w2, b2):
    """latent_state: [B, latent_dim] -> subgoal logits [B, num_subgoals] (f32)."""
    num_subgoals = w2.shape[1]
    return _planner_call(planner_logits_kernel, num_subgoals, jnp.float32,
                         latent_state, w1, b1, w2, b2)


@jax.jit
def select_subgoal(latent_state, w1, b1, w2, b2):
    """Greedy subgoal index [B] (int32).  Softmax is monotone, so argmax of logits
    is computed directly inside the kernel; no logits are written to HBM."""
    idx = _planner_call(planner_argmax_kernel, 1, jnp.int32,
                        latent_state, w1, b1, w2, b2)
    return idx[:, 0]


def init_params(key, latent_dim=LATENT_DIM, hidden=HIDDEN, num_subgoals=NUM_SUBGOALS):
    k1, k2, k3, k4 = jax.random.split(key, 4)
    # nn.Linear-style uniform init, weights stored as [in, out].
    lim1 = 1.0 / jnp.sqrt(latent_dim)
    lim2 = 1.0 / jnp.sqrt(hidden)
    w1 = jax.random.uniform(k1, (latent_dim, hidden), jnp.float32, -lim1, lim1)
    b1 = jax.random.uniform(k2, (1, hidden), jnp.float32, -lim1, lim1)
    w2 = jax.random.uniform(k3, (hidden, num_subgoals), jnp.float32, -lim2, lim2)
    b2 = jax.random.uniform(k4, (1, num_subgoals), jnp.float32, -lim2, lim2)
    return w1, b1, w2, b2


if __name__ == "__main__":
    key = jax.random.PRNGKey(0)
    k_x, k_p, k_x2 = jax.random.split(key, 3)

    w1, b1, w2, b2 = init_params(k_p)

    def ref_logits(x):
        # Matched-precision reference: bf16 operands, f32 accumulation, f32 bias/ReLU.
        xb = x.astype(jnp.bfloat16)
        h = jnp.maximum(
            jnp.dot(xb, w1.astype(jnp.bfloat16), preferred_element_type=jnp.float32) + b1,
            0.0)
        return jnp.dot(h.astype(jnp.bfloat16), w2.astype(jnp.bfloat16),
                       preferred_element_type=jnp.float32) + b2

    # --- Small batch: single full-extent block. ---
    B = 8
    latent_state = jax.random.normal(k_x, (B, LATENT_DIM), jnp.float32)

    logits = jax.block_until_ready(
        hierarchical_planner_forward(latent_state, w1, b1, w2, b2))
    assert logits.shape == (B, NUM_SUBGOALS)

    ref = ref_logits(latent_state)
    assert jnp.allclose(logits, ref, atol=1e-2, rtol=1e-2), (
        float(jnp.max(jnp.abs(logits - ref))))

    # Full-f32 reference sanity check (loose: operands were bf16-rounded).
    ref_f32 = jnp.maximum(latent_state @ w1 + b1, 0.0) @ w2 + b2
    assert jnp.allclose(logits, ref_f32, atol=5e-2, rtol=5e-2)

    # Fused greedy selection path.
    idx = jax.block_until_ready(select_subgoal(latent_state, w1, b1, w2, b2))
    assert idx.shape == (B,)
    assert jnp.array_equal(idx, jnp.argmax(logits, axis=-1))

    # --- Larger batch: 2 grid steps + partial last tile, no padding/extra copies of x. ---
    B2 = 100
    latent2 = jax.random.normal(k_x2, (B2, LATENT_DIM), jnp.float32)
    logits2 = jax.block_until_ready(
        hierarchical_planner_forward(latent2, w1, b1, w2, b2))
    assert logits2.shape == (B2, NUM_SUBGOALS)
    assert jnp.allclose(logits2, ref_logits(latent2), atol=1e-2, rtol=1e-2)

    print("KERNEL_OK")
</pallas_src>

<mosaic_0001>
module attributes {stable_mosaic.version = 11 : i64} {
  func.func @planner_logits_kernel(%arg0: i32, %arg1: memref<8x256xf32, #tpu.memory_space<vmem>>, %arg2: memref<256x128xbf16, #tpu.memory_space<vmem>>, %arg3: memref<1x128xf32, #tpu.memory_space<vmem>>, %arg4: memref<128x8xbf16, #tpu.memory_space<vmem>>, %arg5: memref<1x8xf32, #tpu.memory_space<vmem>>, %arg6: memref<8x8xf32, #tpu.memory_space<vmem>>) attributes {dimension_semantics = [#tpu.dimension_semantics<parallel>], iteration_bounds = array<i64: 1>, scalar_prefetch = 0 : i64, scratch_operands = 0 : i64, tpu.core_type = #tpu.core_type<tc>, window_params = [{transform_indices = @transform_0, window_bounds = array<i64: 8, 256>}, {pipeline_mode = #tpu.pipeline_mode<synchronous>, transform_indices = @transform_1, window_bounds = array<i64: 256, 128>}, {pipeline_mode = #tpu.pipeline_mode<synchronous>, transform_indices = @transform_2, window_bounds = array<i64: 1, 128>}, {pipeline_mode = #tpu.pipeline_mode<synchronous>, transform_indices = @transform_3, window_bounds = array<i64: 128, 8>}, {pipeline_mode = #tpu.pipeline_mode<synchronous>, transform_indices = @transform_4, window_bounds = array<i64: 1, 8>}, {transform_indices = @transform_5, window_bounds = array<i64: 8, 8>}]} {
    %c0 = arith.constant 0 : index
    %c0_0 = arith.constant 0 : index
    %0 = vector.load %arg1[%c0, %c0_0] : memref<8x256xf32, #tpu.memory_space<vmem>>, vector<8x256xf32>
    %1 = arith.truncf %0 : vector<8x256xf32> to vector<8x256xbf16>
    %c0_1 = arith.constant 0 : index
    %c0_2 = arith.constant 0 : index
    %2 = vector.load %arg2[%c0_1, %c0_2] : memref<256x128xbf16, #tpu.memory_space<vmem>>, vector<256x128xbf16>
    %cst = arith.constant dense<0.000000e+00> : vector<8x128xf32>
    %3 = tpu.matmul %1, %2, %cst {dimension_numbers = #tpu.dot_dimension_numbers<[1], [0], [0], [1], [0, 0, 1, 1], [], []>} : vector<8x256xbf16>, vector<256x128xbf16>, vector<8x128xf32> -> vector<8x128xf32>
    %c0_3 = arith.constant 0 : index
    %c0_4 = arith.constant 0 : index
    %4 = vector.load %arg3[%c0_3, %c0_4] : memref<1x128xf32, #tpu.memory_space<vmem>>, vector<1x128xf32>
    %5 = vector.broadcast %4 : vector<1x128xf32> to vector<8x128xf32>
    %6 = arith.addf %3, %5 : vector<8x128xf32>
    %cst_5 = arith.constant 0.000000e+00 : f32
    %7 = vector.broadcast %cst_5 : f32 to vector<8x128xf32>
    %8 = arith.maximumf %6, %7 : vector<8x128xf32>
    %9 = arith.truncf %8 : vector<8x128xf32> to vector<8x128xbf16>
    %c0_6 = arith.constant 0 : index
    %c0_7 = arith.constant 0 : index
    %10 = vector.load %arg4[%c0_6, %c0_7] : memref<128x8xbf16, #tpu.memory_space<vmem>>, vector<128x8xbf16>
    %cst_8 = arith.constant dense<0.000000e+00> : vector<8x8xf32>
    %11 = tpu.matmul %9, %10, %cst_8 {dimension_numbers = #tpu.dot_dimension_numbers<[1], [0], [0], [1], [0, 0, 1, 1], [], []>} : vector<8x128xbf16>, vector<128x8xbf16>, vector<8x8xf32> -> vector<8x8xf32>
    %c0_9 = arith.constant 0 : index
    %c0_10 = arith.constant 0 : index
    %12 = vector.load %arg5[%c0_9, %c0_10] : memref<1x8xf32, #tpu.memory_space<vmem>>, vector<1x8xf32>
    %13 = vector.broadcast %12 : vector<1x8xf32> to vector<8x8xf32>
    %14 = arith.addf %11, %13 : vector<8x8xf32>
    %c0_11 = arith.constant 0 : index
    %c0_12 = arith.constant 0 : index
    %15 = vector.load %arg6[%c0_11, %c0_12] : memref<8x8xf32, #tpu.memory_space<vmem>>, vector<8x8xf32>
    tpu.vector_store %arg6[%c0_11, %c0_12], %14 {strides = array<i32>} : memref<8x8xf32, #tpu.memory_space<vmem>>, vector<8x8xf32>,
    return
  }
  func.func @transform_0(%arg0: i32) -> (i32, i32) {
    %c0_i32 = arith.constant 0 : i32
    %c0_i32_0 = arith.constant 0 : i32
    return %arg0, %c0_i32 : i32, i32
  }
  func.func @transform_1(%arg0: i32) -> (i32, i32) {
    %c0_i32 = arith.constant 0 : i32
    %c0_i32_0 = arith.constant 0 : i32
    %c0_i32_1 = arith.constant 0 : i32
    return %c0_i32, %c0_i32_0 : i32, i32
  }
  func.func @transform_2(%arg0: i32) -> (i32, i32) {
    %c0_i32 = arith.constant 0 : i32
    %c0_i32_0 = arith.constant 0 : i32
    %c0_i32_1 = arith.constant 0 : i32
    return %c0_i32, %c0_i32_0 : i32, i32
  }
  func.func @transform_3(%arg0: i32) -> (i32, i32) {
    %c0_i32 = arith.constant 0 : i32
    %c0_i32_0 = arith.constant 0 : i32
    %c0_i32_1 = arith.constant 0 : i32
    return %c0_i32, %c0_i32_0 : i32, i32
  }
  func.func @transform_4(%arg0: i32) -> (i32, i32) {
    %c0_i32 = arith.constant 0 : i32
    %c0_i32_0 = arith.constant 0 : i32
    %c0_i32_1 = arith.constant 0 : i32
    return %c0_i32, %c0_i32_0 : i32, i32
  }
  func.func @transform_5(%arg0: i32) -> (i32, i32) {
    %c0_i32 = arith.constant 0 : i32
    %c0_i32_0 = arith.constant 0 : i32
    return %arg0, %c0_i32 : i32, i32
  }
}

</mosaic_0001>

<llo_original>
// kernel: hierarchical_planner_forward.1
$region0: #{hierarchical_planner_forward.1}
  #allocation0 [shape = 'u32[]', space=smem, size = 0x4, offset = 0x4, fixed_abs, tag = 'smem constant byte address 0x4 - core index']
  #allocation1 [shape = 'u32[72,128]{1,0:T(1,128)}', space=vmem, size = 0x9000, scoped, tag = 'internal scratch']
  %s0 = inlined_call_operand.vmem [shape: f32[8,256], index: 0, kind: input, shape index: {}]
  %s1 = inlined_call_operand.vmem [shape: bf16[256,128], index: 1, kind: input, shape index: {}]
  %s2 = inlined_call_operand.vmem [shape: f32[1,128], index: 2, kind: input, shape index: {}]
  %s3 = inlined_call_operand.vmem [shape: bf16[128,8], index: 3, kind: input, shape index: {}]
  %s4 = inlined_call_operand.vmem [shape: f32[1,8], index: 4, kind: input, shape index: {}]
  %s5 = inlined_call_operand.hbm [shape: f32[8,8], index: 5, kind: output, shape index: {}]
  %s6 = sld [smem:[#allocation0]]
  $region30: #{hierarchical_planner_forward.1} parent=0
    _
  %s8 = ssub.s32 1, %s6
  %s9 = scalar_select 0, %s8, %s6
  $region1: #{hierarchical_planner_forward.1} parent=0
    #allocation2 [shape = 'u8[4096]{0}', space=vmem, size = 0x1000, scoped, tag = 'output window, operand 0, single buffered']
    #allocation3 [shape = 's32[1]{0}', space=sflag, size = 0x4, scoped, tag = 'scoped memory for hierarchical_planner_forward.1']
    %10 = vsyncpa [#allocation3], 0
    // Predicated region
    $region2: #{hierarchical_planner_forward.1} parent=1 // pred_check
      _
    $region3: #{hierarchical_planner_forward.1} parent=1 // pred_check_branch
      %12 = sbr.rel (0) target = $region5
    $region4: #{hierarchical_planner_forward.1} parent=1 // pred_region
      _
    $region5: #{hierarchical_planner_forward.1} parent=1 // pred_fallthru
      _
    // Predicated region
    $region6: #{hierarchical_planner_forward.1} parent=1 // pred_check
      _
    $region7: #{hierarchical_planner_forward.1} parent=1 // pred_check_branch
      %14 = sbr.rel (0) target = $region9
    $region8: #{hierarchical_planner_forward.1} parent=1 // pred_region
      _
    $region9: #{hierarchical_planner_forward.1} parent=1 // pred_fallthru
      _
    // Predicated region
    $region10: #{hierarchical_planner_forward.1} parent=1 // pred_check
      _
    $region11: #{hierarchical_planner_forward.1} parent=1 // pred_check_branch
      %16 = sbr.rel (0) target = $region13
    $region12: #{hierarchical_planner_forward.1} parent=1 // pred_region
      _
    $region13: #{hierarchical_planner_forward.1} parent=1 // pred_fallthru
      _
    // Predicated region
    $region14: #{hierarchical_planner_forward.1} parent=1 // pred_check
      _
    $region15: #{hierarchical_planner_forward.1} parent=1 // pred_check_branch
      %18 = sbr.rel (0) target = $region17
    $region16: #{hierarchical_planner_forward.1} parent=1 // pred_region
      _
    $region17: #{hierarchical_planner_forward.1} parent=1 // pred_fallthru
      _
    // Predicated region
    $region18: #{hierarchical_planner_forward.1} parent=1 // pred_check
      _
    $region19: #{hierarchical_planner_forward.1} parent=1 // pred_check_branch
      %20 = sbr.rel (0) target = $region21
    $region20: #{hierarchical_planner_forward.1} parent=1 // pred_region
      _
    $region21: #{hierarchical_planner_forward.1} parent=1 // pred_fallthru
      _
    %v21 = vld [vmem:[%s0] sm:$0xff]
    %v22 = vld [vmem:[%s0 + $0x8] sm:$0xff]
    %v23 = vpack.c.bf16 %v21, %v21
    %v24 = vpack.c.bf16 %v22, %v22
    %v25 = vld [vmem:[%s1] sm:$0xf]
    %v26 = vld [vmem:[%s1 + $0x4] sm:$0xf]
    %v27 = vld [vmem:[%s1 + $0x8] sm:$0xf]
    %v28 = vld [vmem:[%s1 + $0xc] sm:$0xf]
    %v29 = vld [vmem:[%s1 + $0x10] sm:$0xf]
    %v30 = vld [vmem:[%s1 + $0x14] sm:$0xf]
    %v31 = vld [vmem:[%s1 + $0x18] sm:$0xf]
    %v32 = vld [vmem:[%s1 + $0x1c] sm:$0xf]
    %v33 = vld [vmem:[%s1 + $0x20] sm:$0xf]
    %v34 = vld [vmem:[%s1 + $0x24] sm:$0xf]
    %v35 = vld [vmem:[%s1 + $0x28] sm:$0xf]
    %v36 = vld [vmem:[%s1 + $0x2c] sm:$0xf]
    %v37 = vld [vmem:[%s1 + $0x30] sm:$0xf]
    %v38 = vld [vmem:[%s1 + $0x34] sm:$0xf]
    %v39 = vld [vmem:[%s1 + $0x38] sm:$0xf]
    %v40 = vld [vmem:[%s1 + $0x3c] sm:$0xf]
    %v41 = vld [vmem:[%s1 + $0x40] sm:$0xf]
    %v42 = vld [vmem:[%s1 + $0x44] sm:$0xf]
    %v43 = vld [vmem:[%s1 + $0x48] sm:$0xf]
    %v44 = vld [vmem:[%s1 + $0x4c] sm:$0xf]
    %v45 = vld [vmem:[%s1 + $0x50] sm:$0xf]
    %v46 = vld [vmem:[%s1 + $0x54] sm:$0xf]
    %v47 = vld [vmem:[%s1 + $0x58] sm:$0xf]
    %v48 = vld [vmem:[%s1 + $0x5c] sm:$0xf]
    %v49 = vld [vmem:[%s1 + $0x60] sm:$0xf]
    %v50 = vld [vmem:[%s1 + $0x64] sm:$0xf]
    %v51 = vld [vmem:[%s1 + $0x68] sm:$0xf]
    %v52 = vld [vmem:[%s1 + $0x6c] sm:$0xf]
    %v53 = vld [vmem:[%s1 + $0x70] sm:$0xf]
    %v54 = vld [vmem:[%s1 + $0x74] sm:$0xf]
    %v55 = vld [vmem:[%s1 + $0x78] sm:$0xf]
    %v56 = vld [vmem:[%s1 + $0x7c] sm:$0xf]
    %v57 = vld [vmem:[%s2] sm:$0x1]
    %v59 = vperm.slane %v57, 0
    %v93 = vunpack.c.l.b16 %v25
    %v94 = vunpack.c.l.b16 %v26
    %v95 = vunpack.c.l.b16 %v27
    %v96 = vunpack.c.l.b16 %v28
    %v97 = vunpack.c.l.b16 %v29
    %v98 = vunpack.c.l.b16 %v30
    %v99 = vunpack.c.l.b16 %v31
    %v100 = vunpack.c.l.b16 %v32
    %v101 = vunpack.c.l.b16 %v33
    %v102 = vunpack.c.l.b16 %v34
    %v103 = vunpack.c.l.b16 %v35
    %v104 = vunpack.c.l.b16 %v36
    %v105 = vunpack.c.l.b16 %v37
    %v106 = vunpack.c.l.b16 %v38
    %v107 = vunpack.c.l.b16 %v39
    %v108 = vunpack.c.l.b16 %v40
    %v109 = vunpack.c.l.b16 %v41
    %v110 = vunpack.c.l.b16 %v42
    %v111 = vunpack.c.l.b16 %v43
    %v112 = vunpack.c.l.b16 %v44
    %v113 = vunpack.c.l.b16 %v45
    %v114 = vunpack.c.l.b16 %v46
    %v115 = vunpack.c.l.b16 %v47
    %v116 = vunpack.c.l.b16 %v48
    %v117 = vunpack.c.l.b16 %v49
    %v118 = vunpack.c.l.b16 %v50
    %v119 = vunpack.c.l.b16 %v51
    %v120 = vunpack.c.l.b16 %v52
    %v121 = vunpack.c.l.b16 %v53
    %v122 = vunpack.c.l.b16 %v54
    %v123 = vunpack.c.l.b16 %v55
    %v124 = vunpack.c.l.b16 %v56
    %v125 = vpack.c.b16 %v94, %v93
    %v126 = vpack.c.b16 %v96, %v95
    %v127 = vpack.c.b16 %v98, %v97
    %v128 = vpack.c.b16 %v100, %v99
    %v129 = vpack.c.b16 %v102, %v101
    %v130 = vpack.c.b16 %v104, %v103
    %v131 = vpack.c.b16 %v106, %v105
    %v132 = vpack.c.b16 %v108, %v107
    %v133 = vpack.c.b16 %v110, %v109
    %v134 = vpack.c.b16 %v112, %v111
    %v135 = vpack.c.b16 %v114, %v113
    %v136 = vpack.c.b16 %v116, %v115
    %v137 = vpack.c.b16 %v118, %v117
    %v138 = vpack.c.b16 %v120, %v119
    %v139 = vpack.c.b16 %v122, %v121
    %v140 = vpack.c.b16 %v124, %v123
    %157 = vmatpush.bf16.msra.mxu0 %v132
    %158 = vmatpush.bf16.msra.mxu0 %v131
    %159 = vmatpush.bf16.msra.mxu0 %v130
    %160 = vmatpush.bf16.msra.mxu0 %v129
    %161 = vmatpush.bf16.msra.mxu0 %v128
    %162 = vmatpush.bf16.msra.mxu0 %v127
    %163 = vmatpush.bf16.msra.mxu0 %v126
    %164 = vmatpush.bf16.msra.mxu0 %v125
    %165 = vmatmul.bf16.gmra.mxu0 %v23
    %v166 = vpop.f32.mrf.mxu0
    %v167 = vadd.f32 %v59, %v166
    %v168 = vpop.f32.mrf.mxu0
    %169 = vdwg.mxu0
    %170 = vmatpush.bf16.msra.mxu0 %v140
    %171 = vmatpush.bf16.msra.mxu0 %v139
    %172 = vmatpush.bf16.msra.mxu0 %v138
    %173 = vmatpush.bf16.msra.mxu0 %v137
    %174 = vmatpush.bf16.msra.mxu0 %v136
    %175 = vmatpush.bf16.msra.mxu0 %v135
    %176 = vmatpush.bf16.msra.mxu0 %v134
    %177 = vmatpush.bf16.msra.mxu0 %v133
    %178 = vmatmul.bf16.gmra.mxu0 %v24
    %v179 = vpop.f32.mrf.mxu0
    %v180 = vadd.f32 %v167, %v179
    %v181 = vpop.f32.mrf.mxu0
    %182 = vdwg.mxu0
    %v183 = vmax.f32 %v180, 0.0
    %v184 = vpack.c.bf16 %v183, %v183
    %v185 = vld [vmem:[%s3] sm:$0xf]
    %v186 = vld [vmem:[%s3 + $0x4] sm:$0xf]
    %v187 = vld [vmem:[%s3 + $0x8] sm:$0xf]
    %v188 = vld [vmem:[%s3 + $0xc] sm:$0xf]
    %v189 = vld [vmem:[%s3 + $0x10] sm:$0xf]
    %v190 = vld [vmem:[%s3 + $0x14] sm:$0xf]
    %v191 = vld [vmem:[%s3 + $0x18] sm:$0xf]
    %v192 = vld [vmem:[%s3 + $0x1c] sm:$0xf]
    %v193 = vld [vmem:[%s3 + $0x20] sm:$0xf]
    %v194 = vld [vmem:[%s3 + $0x24] sm:$0xf]
    %v195 = vld [vmem:[%s3 + $0x28] sm:$0xf]
    %v196 = vld [vmem:[%s3 + $0x2c] sm:$0xf]
    %v197 = vld [vmem:[%s3 + $0x30] sm:$0xf]
    %v198 = vld [vmem:[%s3 + $0x34] sm:$0xf]
    %v199 = vld [vmem:[%s3 + $0x38] sm:$0xf]
    %v200 = vld [vmem:[%s3 + $0x3c] sm:$0xf]
    %v201 = vld [vmem:[%s4] sm:$0x1]
    %v203 = vperm.slane %v201, 0
    %v221 = vunpack.c.l.b16 %v185
    %v222 = vunpack.c.l.b16 %v186
    %v223 = vunpack.c.l.b16 %v187
    %v224 = vunpack.c.l.b16 %v188
    %v225 = vunpack.c.l.b16 %v189
    %v226 = vunpack.c.l.b16 %v190
    %v227 = vunpack.c.l.b16 %v191
    %v228 = vunpack.c.l.b16 %v192
    %v229 = vunpack.c.l.b16 %v193
    %v230 = vunpack.c.l.b16 %v194
    %v231 = vunpack.c.l.b16 %v195
    %v232 = vunpack.c.l.b16 %v196
    %v233 = vunpack.c.l.b16 %v197
    %v234 = vunpack.c.l.b16 %v198
    %v235 = vunpack.c.l.b16 %v199
    %v236 = vunpack.c.l.b16 %v200
    %v237 = vpack.c.b16 %v222, %v221
    %v238 = vpack.c.b16 %v224, %v223
    %v239 = vpack.c.b16 %v226, %v225
    %v240 = vpack.c.b16 %v228, %v227
    %v241 = vpack.c.b16 %v230, %v229
    %v242 = vpack.c.b16 %v232, %v231
    %v243 = vpack.c.b16 %v234, %v233
    %v244 = vpack.c.b16 %v236, %v235
    %253 = vmatpush.bf16.msra.mxu0 %v244
    %254 = vmatpush.bf16.msra.mxu0 %v243
    %255 = vmatpush.bf16.msra.mxu0 %v242
    %256 = vmatpush.bf16.msra.mxu0 %v241
    %257 = vmatpush.bf16.msra.mxu0 %v240
    %258 = vmatpush.bf16.msra.mxu0 %v239
    %259 = vmatpush.bf16.msra.mxu0 %v238
    %260 = vmatpush.bf16.msra.mxu0 %v237
    %261 = vmatmul.bf16.gmra.mxu0 %v184
    %v262 = vpop.f32.mrf.mxu0
    %v263 = vadd.f32 %v203, %v262
    %v264 = vpop.f32.mrf.mxu0
    %265 = vdwg.mxu0
    %vm266 = vcmask 64512
    %267 = vst.msk [vmem:[#allocation2] sm:$0xff] %vm266, %v263
    // Predicated region
    $region22: #{hierarchical_planner_forward.1} parent=1 // pred_check
      _
    $region23: #{hierarchical_planner_forward.1} parent=1 // pred_check_branch
      %269 = sbr.rel (0) target = $region25
    $region24: #{hierarchical_planner_forward.1} parent=1 // pred_region
      %271 = vsyncadd [#allocation3], 0
      %s273 = sshll.u32 [#allocation2], 4
      %s274 = int_to_ptr.vmem [resolvable:$true] %s273
      %s275 = sshll.u32 %s5, 4
      %s276 = int_to_ptr.hbm [resolvable:$true] %s275
      %278 = dma.vmem_to_hbm [thread:$0]  %s274, 128, %s276, [#allocation3]
    $region25: #{hierarchical_planner_forward.1} parent=1 // pred_fallthru
      _
    // Predicated region
    $region26: #{hierarchical_planner_forward.1} parent=1 // pred_check
      _
    $region27: #{hierarchical_planner_forward.1} parent=1 // pred_check_branch
      %280 = sbr.rel (0) target = $region29
    $region28: #{hierarchical_planner_forward.1} parent=1 // pred_region
      %282 = dma.done [#allocation3], 128
    $region29: #{hierarchical_planner_forward.1} parent=1 // pred_fallthru
      _
    %283 = vsyncpa [#allocation3], 1

</llo_original>
